<compile_context>
chip_gen: v5e
topology: v5e:2x2
jax: 0.10.0
libtpu: 0.0.40
codegen_flags: <defaults>
</compile_context>

<pallas_src>
import functools

import jax
import jax.numpy as jnp
from jax import lax
from jax.experimental import pallas as pl
from jax.experimental.pallas import tpu as pltpu

SIM_COEFF = 25.0
STD_COEFF = 25.0
COV_COEFF = 1.0

# Contract over axis 0 of both operands: x^T @ x without materializing the transpose.
_TN = (((0,), (0,)), ((), ()))


def _round_up(v, m):
    return (v + m - 1) // m * m


def _vicreg_kernel(x_ref, y_ref, loss_ref,
                   sx_ref, sy_ref, sxx_ref, syy_ref, sd_ref, xtx_ref, yty_ref,
                   *, b_real, d_real):
    step = pl.program_id(0)

    @pl.when(step == 0)
    def _init():
        sx_ref[...] = jnp.zeros_like(sx_ref)
        sy_ref[...] = jnp.zeros_like(sy_ref)
        sxx_ref[...] = jnp.zeros_like(sxx_ref)
        syy_ref[...] = jnp.zeros_like(syy_ref)
        sd_ref[...] = jnp.zeros_like(sd_ref)
        xtx_ref[...] = jnp.zeros_like(xtx_ref)
        yty_ref[...] = jnp.zeros_like(yty_ref)

    xv = x_ref[...]                      # native dtype (bf16 ok) -> MXU operands
    yv = y_ref[...]
    xf = xv.astype(jnp.float32)          # f32 for element-wise moment accumulation
    yf = yv.astype(jnp.float32)

    sx_ref[...] += jnp.sum(xf, axis=0, keepdims=True)
    sy_ref[...] += jnp.sum(yf, axis=0, keepdims=True)
    sxx_ref[...] += jnp.sum(xf * xf, axis=0, keepdims=True)
    syy_ref[...] += jnp.sum(yf * yf, axis=0, keepdims=True)
    d = xf - yf
    sd_ref[...] += jnp.sum(d * d)

    xtx_ref[...] += lax.dot_general(xv, xv, _TN, preferred_element_type=jnp.float32)
    yty_ref[...] += lax.dot_general(yv, yv, _TN, preferred_element_type=jnp.float32)

    @pl.when(step == pl.num_programs(0) - 1)
    def _finalize():
        b = jnp.float32(b_real)
        inv_bm1 = jnp.float32(1.0 / (b_real - 1))
        inv_d = jnp.float32(1.0 / d_real)

        sx = sx_ref[...]
        sy = sy_ref[...]
        # ddof=1 variance per feature == diagonal of the covariance matrix (reused below).
        var_x = (sxx_ref[...] - sx * sx / b) * inv_bm1
        var_y = (syy_ref[...] - sy * sy / b) * inv_bm1

        col = lax.broadcasted_iota(jnp.int32, sx.shape, 1)
        col_mask = col < d_real          # mask lane padding out of the std term

        std_x = jnp.sqrt(var_x + 1e-4)
        std_y = jnp.sqrt(var_y + 1e-4)
        std_loss = (jnp.sum(jnp.where(col_mask, jnp.maximum(1.0 - std_x, 0.0), 0.0))
                    + jnp.sum(jnp.where(col_mask, jnp.maximum(1.0 - std_y, 0.0), 0.0))
                    ) * inv_d

        sim_loss = sd_ref[...] * (inv_d / b)        # (1, 1)

        cov_x = (xtx_ref[...]
                 - lax.dot_general(sx, sx, _TN, preferred_element_type=jnp.float32) / b
                 ) * inv_bm1
        cov_y = (yty_ref[...]
                 - lax.dot_general(sy, sy, _TN, preferred_element_type=jnp.float32) / b
                 ) * inv_bm1
        # Off-diagonal Frobenius: ||cov||_F^2 - sum(diag^2); diag(cov) == var (free).
        cov_loss = ((jnp.sum(cov_x * cov_x) - jnp.sum(var_x * var_x))
                    + (jnp.sum(cov_y * cov_y) - jnp.sum(var_y * var_y))) * inv_d

        loss_ref[...] = (SIM_COEFF * sim_loss + STD_COEFF * std_loss
                         + COV_COEFF * cov_loss)


def vicreg_loss(x, y, *, row_tile=512):
    assert x.shape == y.shape and x.ndim == 2
    B, D = x.shape
    assert B >= 2, "VICReg variance uses ddof=1 (needs B >= 2)"

    Dp = _round_up(D, 128)                                 # lane-dense feature dim
    TB = min(_round_up(B, 8), _round_up(row_tile, 8))      # >= 8 sublanes per tile
    Bp = _round_up(B, TB)
    if (Bp, Dp) != (B, D):
        x = jnp.pad(x, ((0, Bp - B), (0, Dp - D)))
        y = jnp.pad(y, ((0, Bp - B), (0, Dp - D)))

    itemsize = jnp.dtype(x.dtype).itemsize
    est = (2 * 2 * TB * Dp * itemsize      # double-buffered x/y input tiles
           + 2 * Dp * Dp * 4               # X^T X / Y^T Y f32 accumulators
           + 4 * Dp * 4 + 256)             # per-feature sums + scalars
    vmem_limit = int(min(max(4 * est, 16 << 20), 64 << 20))

    kernel = functools.partial(_vicreg_kernel, b_real=B, d_real=D)

    out = pl.pallas_call(
        kernel,
        out_shape=jax.ShapeDtypeStruct((1, 1), jnp.float32),
        grid_spec=pltpu.PrefetchScalarGridSpec(
            num_scalar_prefetch=0,
            grid=(Bp // TB,),
            in_specs=[
                pl.BlockSpec((TB, Dp), lambda i: (i, 0)),
                pl.BlockSpec((TB, Dp), lambda i: (i, 0)),
            ],
            out_specs=pl.BlockSpec((1, 1), lambda i: (0, 0)),
            scratch_shapes=[
                pltpu.VMEM((1, Dp), jnp.float32),   # sum x
                pltpu.VMEM((1, Dp), jnp.float32),   # sum y
                pltpu.VMEM((1, Dp), jnp.float32),   # sum x^2
                pltpu.VMEM((1, Dp), jnp.float32),   # sum y^2
                pltpu.VMEM((1, 1), jnp.float32),    # sum (x - y)^2
                pltpu.VMEM((Dp, Dp), jnp.float32),  # X^T X
                pltpu.VMEM((Dp, Dp), jnp.float32),  # Y^T Y
            ]),
        compiler_params=pltpu.CompilerParams(
            dimension_semantics=("arbitrary",),     # batch axis carries the reduction
            vmem_limit_bytes=vmem_limit),
    )(x, y)
    return out[0, 0]


def vicreg_loss_ref(x, y):
    """Pure-JAX reference mirroring the PyTorch forward."""
    x = x.astype(jnp.float32)
    y = y.astype(jnp.float32)
    B, D = x.shape
    sim_loss = jnp.mean((x - y) ** 2)
    std_x = jnp.sqrt(jnp.var(x, axis=0, ddof=1) + 1e-4)
    std_y = jnp.sqrt(jnp.var(y, axis=0, ddof=1) + 1e-4)
    std_loss = jnp.mean(jnp.maximum(1.0 - std_x, 0.0)) + jnp.mean(jnp.maximum(1.0 - std_y, 0.0))
    xc = x - x.mean(axis=0)
    yc = y - y.mean(axis=0)
    cov_x = xc.T @ xc / (B - 1)
    cov_y = yc.T @ yc / (B - 1)
    off = lambda c: jnp.sum(c ** 2) - jnp.sum(jnp.diag(c) ** 2)
    cov_loss = off(cov_x) / D + off(cov_y) / D
    return SIM_COEFF * sim_loss + STD_COEFF * std_loss + COV_COEFF * cov_loss


if __name__ == "__main__":
    key = jax.random.PRNGKey(0)
    kx, ky = jax.random.split(key)

    # Shapes the forward implies: [B, D] projector feature vectors.
    B, D = 8, 32
    x = jax.random.normal(kx, (B, D), dtype=jnp.float32)
    y = jax.random.normal(ky, (B, D), dtype=jnp.float32)
    loss = jax.block_until_ready(vicreg_loss(x, y))
    ref = jax.block_until_ready(vicreg_loss_ref(x, y))
    assert jnp.allclose(loss, ref, rtol=1e-3, atol=1e-3), (loss, ref)

    # Also exercise the multi-tile streaming path (grid > 1, row + lane padding).
    kx2, ky2 = jax.random.split(jax.random.PRNGKey(0), 2)
    B2, D2 = 40, 96
    x2 = jax.random.normal(kx2, (B2, D2), dtype=jnp.float32)
    y2 = jax.random.normal(ky2, (B2, D2), dtype=jnp.float32)
    loss2 = jax.block_until_ready(vicreg_loss(x2, y2, row_tile=16))
    ref2 = jax.block_until_ready(vicreg_loss_ref(x2, y2))
    assert jnp.allclose(loss2, ref2, rtol=1e-3, atol=1e-3), (loss2, ref2)

    print("KERNEL_OK")
</pallas_src>

<mosaic_0001>
module attributes {stable_mosaic.version = 11 : i64} {
  func.func @_vicreg_kernel(%arg0: i32, %arg1: memref<8x128xf32, #tpu.memory_space<vmem>>, %arg2: memref<8x128xf32, #tpu.memory_space<vmem>>, %arg3: memref<1x1xf32, #tpu.memory_space<vmem>>, %arg4: memref<1x128xf32, #tpu.memory_space<vmem>>, %arg5: memref<1x128xf32, #tpu.memory_space<vmem>>, %arg6: memref<1x128xf32, #tpu.memory_space<vmem>>, %arg7: memref<1x128xf32, #tpu.memory_space<vmem>>, %arg8: memref<1x1xf32, #tpu.memory_space<vmem>>, %arg9: memref<128x128xf32, #tpu.memory_space<vmem>>, %arg10: memref<128x128xf32, #tpu.memory_space<vmem>>) attributes {dimension_semantics = [#tpu.dimension_semantics<arbitrary>], iteration_bounds = array<i64: 1>, scalar_prefetch = 0 : i64, scratch_operands = 7 : i64, tpu.core_type = #tpu.core_type<tc>, window_params = [{transform_indices = @transform_0, window_bounds = array<i64: 8, 128>}, {transform_indices = @transform_1, window_bounds = array<i64: 8, 128>}, {pipeline_mode = #tpu.pipeline_mode<synchronous>, transform_indices = @transform_2, window_bounds = array<i64: 1, 1>}]} {
    %c0_i32 = arith.constant 0 : i32
    %0 = arith.cmpi eq, %arg0, %c0_i32 : i32
    %1 = arith.extui %0 : i1 to i32
    %c0_i32_0 = arith.constant 0 : i32
    %2 = arith.cmpi ne, %1, %c0_i32_0 : i32
    scf.if %2 {
      %cst_40 = arith.constant 0.000000e+00 : f32
      %48 = vector.broadcast %cst_40 : f32 to vector<1x128xf32>
      %c0_41 = arith.constant 0 : index
      %c0_42 = arith.constant 0 : index
      %49 = vector.load %arg4[%c0_41, %c0_42] : memref<1x128xf32, #tpu.memory_space<vmem>>, vector<1x128xf32>
      tpu.vector_store %arg4[%c0_41, %c0_42], %48 {strides = array<i32>} : memref<1x128xf32, #tpu.memory_space<vmem>>, vector<1x128xf32>,
      %cst_43 = arith.constant 0.000000e+00 : f32
      %50 = vector.broadcast %cst_43 : f32 to vector<1x128xf32>
      %c0_44 = arith.constant 0 : index
      %c0_45 = arith.constant 0 : index
      %51 = vector.load %arg5[%c0_44, %c0_45] : memref<1x128xf32, #tpu.memory_space<vmem>>, vector<1x128xf32>
      tpu.vector_store %arg5[%c0_44, %c0_45], %50 {strides = array<i32>} : memref<1x128xf32, #tpu.memory_space<vmem>>, vector<1x128xf32>,
      %cst_46 = arith.constant 0.000000e+00 : f32
      %52 = vector.broadcast %cst_46 : f32 to vector<1x128xf32>
      %c0_47 = arith.constant 0 : index
      %c0_48 = arith.constant 0 : index
      %53 = vector.load %arg6[%c0_47, %c0_48] : memref<1x128xf32, #tpu.memory_space<vmem>>, vector<1x128xf32>
      tpu.vector_store %arg6[%c0_47, %c0_48], %52 {strides = array<i32>} : memref<1x128xf32, #tpu.memory_space<vmem>>, vector<1x128xf32>,
      %cst_49 = arith.constant 0.000000e+00 : f32
      %54 = vector.broadcast %cst_49 : f32 to vector<1x128xf32>
      %c0_50 = arith.constant 0 : index
      %c0_51 = arith.constant 0 : index
      %55 = vector.load %arg7[%c0_50, %c0_51] : memref<1x128xf32, #tpu.memory_space<vmem>>, vector<1x128xf32>
      tpu.vector_store %arg7[%c0_50, %c0_51], %54 {strides = array<i32>} : memref<1x128xf32, #tpu.memory_space<vmem>>, vector<1x128xf32>,
      %cst_52 = arith.constant 0.000000e+00 : f32
      %56 = vector.broadcast %cst_52 : f32 to vector<1x1xf32>
      %c0_53 = arith.constant 0 : index
      %c0_54 = arith.constant 0 : index
      %57 = vector.load %arg8[%c0_53, %c0_54] : memref<1x1xf32, #tpu.memory_space<vmem>>, vector<1x1xf32>
      tpu.vector_store %arg8[%c0_53, %c0_54], %56 {strides = array<i32>} : memref<1x1xf32, #tpu.memory_space<vmem>>, vector<1x1xf32>,
      %cst_55 = arith.constant 0.000000e+00 : f32
      %58 = vector.broadcast %cst_55 : f32 to vector<128x128xf32>
      %c0_56 = arith.constant 0 : index
      %c0_57 = arith.constant 0 : index
      %59 = vector.load %arg9[%c0_56, %c0_57] : memref<128x128xf32, #tpu.memory_space<vmem>>, vector<128x128xf32>
      tpu.vector_store %arg9[%c0_56, %c0_57], %58 {strides = array<i32>} : memref<128x128xf32, #tpu.memory_space<vmem>>, vector<128x128xf32>,
      %cst_58 = arith.constant 0.000000e+00 : f32
      %60 = vector.broadcast %cst_58 : f32 to vector<128x128xf32>
      %c0_59 = arith.constant 0 : index
      %c0_60 = arith.constant 0 : index
      %61 = vector.load %arg10[%c0_59, %c0_60] : memref<128x128xf32, #tpu.memory_space<vmem>>, vector<128x128xf32>
      tpu.vector_store %arg10[%c0_59, %c0_60], %60 {strides = array<i32>} : memref<128x128xf32, #tpu.memory_space<vmem>>, vector<128x128xf32>,
    } else {
    }
    %c0 = arith.constant 0 : index
    %c0_1 = arith.constant 0 : index
    %3 = vector.load %arg1[%c0, %c0_1] : memref<8x128xf32, #tpu.memory_space<vmem>>, vector<8x128xf32>
    %c0_2 = arith.constant 0 : index
    %c0_3 = arith.constant 0 : index
    %4 = vector.load %arg2[%c0_2, %c0_3] : memref<8x128xf32, #tpu.memory_space<vmem>>, vector<8x128xf32>
    %c0_4 = arith.constant 0 : index
    %c0_5 = arith.constant 0 : index
    %5 = vector.load %arg4[%c0_4, %c0_5] : memref<1x128xf32, #tpu.memory_space<vmem>>, vector<1x128xf32>
    %cst = arith.constant dense<0.000000e+00> : vector<128xf32>
    %6 = vector.multi_reduction <add>, %3, %cst [0] : vector<8x128xf32> to vector<128xf32>
    %7 = vector.shape_cast %6 : vector<128xf32> to vector<1x128xf32>
    %8 = arith.addf %5, %7 : vector<1x128xf32>
    %c0_6 = arith.constant 0 : index
    %c0_7 = arith.constant 0 : index
    %9 = vector.load %arg4[%c0_6, %c0_7] : memref<1x128xf32, #tpu.memory_space<vmem>>, vector<1x128xf32>
    tpu.vector_store %arg4[%c0_6, %c0_7], %8 {strides = array<i32>} : memref<1x128xf32, #tpu.memory_space<vmem>>, vector<1x128xf32>,
    %c0_8 = arith.constant 0 : index
    %c0_9 = arith.constant 0 : index
    %10 = vector.load %arg5[%c0_8, %c0_9] : memref<1x128xf32, #tpu.memory_space<vmem>>, vector<1x128xf32>
    %cst_10 = arith.constant dense<0.000000e+00> : vector<128xf32>
    %11 = vector.multi_reduction <add>, %4, %cst_10 [0] : vector<8x128xf32> to vector<128xf32>
    %12 = vector.shape_cast %11 : vector<128xf32> to vector<1x128xf32>
    %13 = arith.addf %10, %12 : vector<1x128xf32>
    %c0_11 = arith.constant 0 : index
    %c0_12 = arith.constant 0 : index
    %14 = vector.load %arg5[%c0_11, %c0_12] : memref<1x128xf32, #tpu.memory_space<vmem>>, vector<1x128xf32>
    tpu.vector_store %arg5[%c0_11, %c0_12], %13 {strides = array<i32>} : memref<1x128xf32, #tpu.memory_space<vmem>>, vector<1x128xf32>,
    %c0_13 = arith.constant 0 : index
    %c0_14 = arith.constant 0 : index
    %15 = vector.load %arg6[%c0_13, %c0_14] : memref<1x128xf32, #tpu.memory_space<vmem>>, vector<1x128xf32>
    %16 = arith.mulf %3, %3 : vector<8x128xf32>
    %cst_15 = arith.constant dense<0.000000e+00> : vector<128xf32>
    %17 = vector.multi_reduction <add>, %16, %cst_15 [0] : vector<8x128xf32> to vector<128xf32>
    %18 = vector.shape_cast %17 : vector<128xf32> to vector<1x128xf32>
    %19 = arith.addf %15, %18 : vector<1x128xf32>
    %c0_16 = arith.constant 0 : index
    %c0_17 = arith.constant 0 : index
    %20 = vector.load %arg6[%c0_16, %c0_17] : memref<1x128xf32, #tpu.memory_space<vmem>>, vector<1x128xf32>
    tpu.vector_store %arg6[%c0_16, %c0_17], %19 {strides = array<i32>} : memref<1x128xf32, #tpu.memory_space<vmem>>, vector<1x128xf32>,
    %c0_18 = arith.constant 0 : index
    %c0_19 = arith.constant 0 : index
    %21 = vector.load %arg7[%c0_18, %c0_19] : memref<1x128xf32, #tpu.memory_space<vmem>>, vector<1x128xf32>
    %22 = arith.mulf %4, %4 : vector<8x128xf32>
    %cst_20 = arith.constant dense<0.000000e+00> : vector<128xf32>
    %23 = vector.multi_reduction <add>, %22, %cst_20 [0] : vector<8x128xf32> to vector<128xf32>
    %24 = vector.shape_cast %23 : vector<128xf32> to vector<1x128xf32>
    %25 = arith.addf %21, %24 : vector<1x128xf32>
    %c0_21 = arith.constant 0 : index
    %c0_22 = arith.constant 0 : index
    %26 = vector.load %arg7[%c0_21, %c0_22] : memref<1x128xf32, #tpu.memory_space<vmem>>, vector<1x128xf32>
    tpu.vector_store %arg7[%c0_21, %c0_22], %25 {strides = array<i32>} : memref<1x128xf32, #tpu.memory_space<vmem>>, vector<1x128xf32>,
    %27 = arith.subf %3, %4 : vector<8x128xf32>
    %c0_23 = arith.constant 0 : index
    %c0_24 = arith.constant 0 : index
    %28 = vector.load %arg8[%c0_23, %c0_24] : memref<1x1xf32, #tpu.memory_space<vmem>>, vector<1x1xf32>
    %29 = arith.mulf %27, %27 : vector<8x128xf32>
    %30 = vector.shape_cast %29 : vector<8x128xf32> to vector<1x8x128xf32>
    %cst_25 = arith.constant dense<0.000000e+00> : vector<1xf32>
    %31 = vector.multi_reduction <add>, %30, %cst_25 [1, 2] : vector<1x8x128xf32> to vector<1xf32>
    %32 = vector.shape_cast %31 : vector<1xf32> to vector<1x1x1xf32>
    %33 = vector.extract %32[0, 0, 0] : f32 from vector<1x1x1xf32>
    %34 = vector.broadcast %33 : f32 to vector<1x1xf32>
    %35 = arith.addf %28, %34 : vector<1x1xf32>
    %c0_26 = arith.constant 0 : index
    %c0_27 = arith.constant 0 : index
    %36 = vector.load %arg8[%c0_26, %c0_27] : memref<1x1xf32, #tpu.memory_space<vmem>>, vector<1x1xf32>
    tpu.vector_store %arg8[%c0_26, %c0_27], %35 {strides = array<i32>} : memref<1x1xf32, #tpu.memory_space<vmem>>, vector<1x1xf32>,
    %c0_28 = arith.constant 0 : index
    %c0_29 = arith.constant 0 : index
    %37 = vector.load %arg9[%c0_28, %c0_29] : memref<128x128xf32, #tpu.memory_space<vmem>>, vector<128x128xf32>
    %cst_30 = arith.constant dense<0.000000e+00> : vector<128x128xf32>
    %38 = tpu.matmul %3, %3, %cst_30 {dimension_numbers = #tpu.dot_dimension_numbers<[0], [0], [1], [1], [0, 1, 1, 1], [], []>} : vector<8x128xf32>, vector<8x128xf32>, vector<128x128xf32> -> vector<128x128xf32>
    %39 = arith.addf %37, %38 : vector<128x128xf32>
    %c0_31 = arith.constant 0 : index
    %c0_32 = arith.constant 0 : index
    %40 = vector.load %arg9[%c0_31, %c0_32] : memref<128x128xf32, #tpu.memory_space<vmem>>, vector<128x128xf32>
    tpu.vector_store %arg9[%c0_31, %c0_32], %39 {strides = array<i32>} : memref<128x128xf32, #tpu.memory_space<vmem>>, vector<128x128xf32>,
    %c0_33 = arith.constant 0 : index
    %c0_34 = arith.constant 0 : index
    %41 = vector.load %arg10[%c0_33, %c0_34] : memref<128x128xf32, #tpu.memory_space<vmem>>, vector<128x128xf32>
    %cst_35 = arith.constant dense<0.000000e+00> : vector<128x128xf32>
    %42 = tpu.matmul %4, %4, %cst_35 {dimension_numbers = #tpu.dot_dimension_numbers<[0], [0], [1], [1], [0, 1, 1, 1], [], []>} : vector<8x128xf32>, vector<8x128xf32>, vector<128x128xf32> -> vector<128x128xf32>
    %43 = arith.addf %41, %42 : vector<128x128xf32>
    %c0_36 = arith.constant 0 : index
    %c0_37 = arith.constant 0 : index
    %44 = vector.load %arg10[%c0_36, %c0_37] : memref<128x128xf32, #tpu.memory_space<vmem>>, vector<128x128xf32>
    tpu.vector_store %arg10[%c0_36, %c0_37], %43 {strides = array<i32>} : memref<128x128xf32, #tpu.memory_space<vmem>>, vector<128x128xf32>,
    %c0_i32_38 = arith.constant 0 : i32
    %45 = arith.cmpi eq, %arg0, %c0_i32_38 : i32
    %46 = arith.extui %45 : i1 to i32
    %c0_i32_39 = arith.constant 0 : i32
    %47 = arith.cmpi ne, %46, %c0_i32_39 : i32
    scf.if %47 {
      %c0_40 = arith.constant 0 : index
      %c0_41 = arith.constant 0 : index
      %48 = vector.load %arg4[%c0_40, %c0_41] : memref<1x128xf32, #tpu.memory_space<vmem>>, vector<1x128xf32>
      %c0_42 = arith.constant 0 : index
      %c0_43 = arith.constant 0 : index
      %49 = vector.load %arg5[%c0_42, %c0_43] : memref<1x128xf32, #tpu.memory_space<vmem>>, vector<1x128xf32>
      %c0_44 = arith.constant 0 : index
      %c0_45 = arith.constant 0 : index
      %50 = vector.load %arg6[%c0_44, %c0_45] : memref<1x128xf32, #tpu.memory_space<vmem>>, vector<1x128xf32>
      %51 = arith.mulf %48, %48 : vector<1x128xf32>
      %cst_46 = arith.constant 8.000000e+00 : f32
      %52 = vector.broadcast %cst_46 : f32 to vector<1x128xf32>
      %53 = arith.divf %51, %52 : vector<1x128xf32>
      %54 = arith.subf %50, %53 : vector<1x128xf32>
      %cst_47 = arith.constant 0.142857149 : f32
      %55 = vector.broadcast %cst_47 : f32 to vector<1x128xf32>
      %56 = arith.mulf %54, %55 : vector<1x128xf32>
      %c0_48 = arith.constant 0 : index
      %c0_49 = arith.constant 0 : index
      %57 = vector.load %arg7[%c0_48, %c0_49] : memref<1x128xf32, #tpu.memory_space<vmem>>, vector<1x128xf32>
      %58 = arith.mulf %49, %49 : vector<1x128xf32>
      %cst_50 = arith.constant 8.000000e+00 : f32
      %59 = vector.broadcast %cst_50 : f32 to vector<1x128xf32>
      %60 = arith.divf %58, %59 : vector<1x128xf32>
      %61 = arith.subf %57, %60 : vector<1x128xf32>
      %cst_51 = arith.constant 0.142857149 : f32
      %62 = vector.broadcast %cst_51 : f32 to vector<1x128xf32>
      %63 = arith.mulf %61, %62 : vector<1x128xf32>
      %64 = tpu.iota {dimensions = array<i32: 1>} : vector<1x128xi32>
      %c32_i32 = arith.constant 32 : i32
      %65 = vector.broadcast %c32_i32 : i32 to vector<1x128xi32>
      %66 = arith.cmpi slt, %64, %65 : vector<1x128xi32>
      %cst_52 = arith.constant 9.99999974E-5 : f32
      %67 = vector.broadcast %cst_52 : f32 to vector<1x128xf32>
      %68 = arith.addf %56, %67 : vector<1x128xf32>
      %69 = math.sqrt %68 : vector<1x128xf32>
      %cst_53 = arith.constant 9.99999974E-5 : f32
      %70 = vector.broadcast %cst_53 : f32 to vector<1x128xf32>
      %71 = arith.addf %63, %70 : vector<1x128xf32>
      %72 = math.sqrt %71 : vector<1x128xf32>
      %cst_54 = arith.constant 1.000000e+00 : f32
      %73 = vector.broadcast %cst_54 : f32 to vector<1x128xf32>
      %74 = arith.subf %73, %69 : vector<1x128xf32>
      %cst_55 = arith.constant 0.000000e+00 : f32
      %75 = vector.broadcast %cst_55 : f32 to vector<1x128xf32>
      %76 = arith.maximumf %74, %75 : vector<1x128xf32>
      %cst_56 = arith.constant 0.000000e+00 : f32
      %77 = vector.broadcast %cst_56 : f32 to vector<1x128xf32>
      %78 = arith.select %66, %76, %77 : vector<1x128xi1>, vector<1x128xf32>
      %79 = vector.shape_cast %78 : vector<1x128xf32> to vector<1x1x128xf32>
      %cst_57 = arith.constant dense<0.000000e+00> : vector<1xf32>
      %80 = vector.multi_reduction <add>, %79, %cst_57 [1, 2] : vector<1x1x128xf32> to vector<1xf32>
      %81 = vector.shape_cast %80 : vector<1xf32> to vector<1x1x1xf32>
      %82 = vector.extract %81[0, 0, 0] : f32 from vector<1x1x1xf32>
      %cst_58 = arith.constant 1.000000e+00 : f32
      %83 = vector.broadcast %cst_58 : f32 to vector<1x128xf32>
      %84 = arith.subf %83, %72 : vector<1x128xf32>
      %cst_59 = arith.constant 0.000000e+00 : f32
      %85 = vector.broadcast %cst_59 : f32 to vector<1x128xf32>
      %86 = arith.maximumf %84, %85 : vector<1x128xf32>
      %cst_60 = arith.constant 0.000000e+00 : f32
      %87 = vector.broadcast %cst_60 : f32 to vector<1x128xf32>
      %88 = arith.select %66, %86, %87 : vector<1x128xi1>, vector<1x128xf32>
      %89 = vector.shape_cast %88 : vector<1x128xf32> to vector<1x1x128xf32>
      %cst_61 = arith.constant dense<0.000000e+00> : vector<1xf32>
      %90 = vector.multi_reduction <add>, %89, %cst_61 [1, 2] : vector<1x1x128xf32> to vector<1xf32>
      %91 = vector.shape_cast %90 : vector<1xf32> to vector<1x1x1xf32>
      %92 = vector.extract %91[0, 0, 0] : f32 from vector<1x1x1xf32>
      %93 = arith.addf %82, %92 : f32
      %cst_62 = arith.constant 3.125000e-02 : f32
      %94 = arith.mulf %93, %cst_62 : f32
      %c0_63 = arith.constant 0 : index
      %c0_64 = arith.constant 0 : index
      %95 = vector.load %arg8[%c0_63, %c0_64] : memref<1x1xf32, #tpu.memory_space<vmem>>, vector<1x1xf32>
      %cst_65 = arith.constant 3.125000e-02 : f32
      %cst_66 = arith.constant 8.000000e+00 : f32
      %96 = arith.divf %cst_65, %cst_66 : f32
      %97 = vector.broadcast %96 : f32 to vector<1x1xf32>
      %98 = arith.mulf %95, %97 : vector<1x1xf32>
      %c0_67 = arith.constant 0 : index
      %c0_68 = arith.constant 0 : index
      %99 = vector.load %arg9[%c0_67, %c0_68] : memref<128x128xf32, #tpu.memory_space<vmem>>, vector<128x128xf32>
      %cst_69 = arith.constant dense<0.000000e+00> : vector<128x128xf32>
      %100 = tpu.matmul %48, %48, %cst_69 {dimension_numbers = #tpu.dot_dimension_numbers<[0], [0], [1], [1], [0, 1, 1, 1], [], []>} : vector<1x128xf32>, vector<1x128xf32>, vector<128x128xf32> -> vector<128x128xf32>
      %cst_70 = arith.constant 8.000000e+00 : f32
      %101 = vector.broadcast %cst_70 : f32 to vector<128x128xf32>
      %102 = arith.divf %100, %101 : vector<128x128xf32>
      %103 = arith.subf %99, %102 : vector<128x128xf32>
      %cst_71 = arith.constant 0.142857149 : f32
      %104 = vector.broadcast %cst_71 : f32 to vector<128x128xf32>
      %105 = arith.mulf %103, %104 : vector<128x128xf32>
      %c0_72 = arith.constant 0 : index
      %c0_73 = arith.constant 0 : index
      %106 = vector.load %arg10[%c0_72, %c0_73] : memref<128x128xf32, #tpu.memory_space<vmem>>, vector<128x128xf32>
      %cst_74 = arith.constant dense<0.000000e+00> : vector<128x128xf32>
      %107 = tpu.matmul %49, %49, %cst_74 {dimension_numbers = #tpu.dot_dimension_numbers<[0], [0], [1], [1], [0, 1, 1, 1], [], []>} : vector<1x128xf32>, vector<1x128xf32>, vector<128x128xf32> -> vector<128x128xf32>
      %cst_75 = arith.constant 8.000000e+00 : f32
      %108 = vector.broadcast %cst_75 : f32 to vector<128x128xf32>
      %109 = arith.divf %107, %108 : vector<128x128xf32>
      %110 = arith.subf %106, %109 : vector<128x128xf32>
      %cst_76 = arith.constant 0.142857149 : f32
      %111 = vector.broadcast %cst_76 : f32 to vector<128x128xf32>
      %112 = arith.mulf %110, %111 : vector<128x128xf32>
      %113 = arith.mulf %105, %105 : vector<128x128xf32>
      %114 = vector.shape_cast %113 : vector<128x128xf32> to vector<1x128x128xf32>
      %cst_77 = arith.constant dense<0.000000e+00> : vector<1xf32>
      %115 = vector.multi_reduction <add>, %114, %cst_77 [1, 2] : vector<1x128x128xf32> to vector<1xf32>
      %116 = vector.shape_cast %115 : vector<1xf32> to vector<1x1x1xf32>
      %117 = vector.extract %116[0, 0, 0] : f32 from vector<1x1x1xf32>
      %118 = arith.mulf %56, %56 : vector<1x128xf32>
      %119 = vector.shape_cast %118 : vector<1x128xf32> to vector<1x1x128xf32>
      %cst_78 = arith.constant dense<0.000000e+00> : vector<1xf32>
      %120 = vector.multi_reduction <add>, %119, %cst_78 [1, 2] : vector<1x1x128xf32> to vector<1xf32>
      %121 = vector.shape_cast %120 : vector<1xf32> to vector<1x1x1xf32>
      %122 = vector.extract %121[0, 0, 0] : f32 from vector<1x1x1xf32>
      %123 = arith.subf %117, %122 : f32
      %124 = arith.mulf %112, %112 : vector<128x128xf32>
      %125 = vector.shape_cast %124 : vector<128x128xf32> to vector<1x128x128xf32>
      %cst_79 = arith.constant dense<0.000000e+00> : vector<1xf32>
      %126 = vector.multi_reduction <add>, %125, %cst_79 [1, 2] : vector<1x128x128xf32> to vector<1xf32>
      %127 = vector.shape_cast %126 : vector<1xf32> to vector<1x1x1xf32>
      %128 = vector.extract %127[0, 0, 0] : f32 from vector<1x1x1xf32>
      %129 = arith.mulf %63, %63 : vector<1x128xf32>
      %130 = vector.shape_cast %129 : vector<1x128xf32> to vector<1x1x128xf32>
      %cst_80 = arith.constant dense<0.000000e+00> : vector<1xf32>
      %131 = vector.multi_reduction <add>, %130, %cst_80 [1, 2] : vector<1x1x128xf32> to vector<1xf32>
      %132 = vector.shape_cast %131 : vector<1xf32> to vector<1x1x1xf32>
      %133 = vector.extract %132[0, 0, 0] : f32 from vector<1x1x1xf32>
      %134 = arith.subf %128, %133 : f32
      %135 = arith.addf %123, %134 : f32
      %cst_81 = arith.constant 3.125000e-02 : f32
      %136 = arith.mulf %135, %cst_81 : f32
      %cst_82 = arith.constant 2.500000e+01 : f32
      %137 = vector.broadcast %cst_82 : f32 to vector<1x1xf32>
      %138 = arith.mulf %137, %98 : vector<1x1xf32>
      %cst_83 = arith.constant 2.500000e+01 : f32
      %139 = arith.mulf %cst_83, %94 : f32
      %140 = vector.broadcast %139 : f32 to vector<1x1xf32>
      %141 = arith.addf %138, %140 : vector<1x1xf32>
      %cst_84 = arith.constant 1.000000e+00 : f32
      %142 = arith.mulf %cst_84, %136 : f32
      %143 = vector.broadcast %142 : f32 to vector<1x1xf32>
      %144 = arith.addf %141, %143 : vector<1x1xf32>
      %c0_85 = arith.constant 0 : index
      %c0_86 = arith.constant 0 : index
      %145 = vector.load %arg3[%c0_85, %c0_86] : memref<1x1xf32, #tpu.memory_space<vmem>>, vector<1x1xf32>
      tpu.vector_store %arg3[%c0_85, %c0_86], %144 {strides = array<i32>} : memref<1x1xf32, #tpu.memory_space<vmem>>, vector<1x1xf32>,
    } else {
    }
    return
  }
  func.func @transform_0(%arg0: i32) -> (i32, i32) {
    %c0_i32 = arith.constant 0 : i32
    %c0_i32_0 = arith.constant 0 : i32
    return %arg0, %c0_i32 : i32, i32
  }
  func.func @transform_1(%arg0: i32) -> (i32, i32) {
    %c0_i32 = arith.constant 0 : i32
    %c0_i32_0 = arith.constant 0 : i32
    return %arg0, %c0_i32 : i32, i32
  }
  func.func @transform_2(%arg0: i32) -> (i32, i32) {
    %c0_i32 = arith.constant 0 : i32
    %c0_i32_0 = arith.constant 0 : i32
    %c0_i32_1 = arith.constant 0 : i32
    return %c0_i32, %c0_i32_0 : i32, i32
  }
}

</mosaic_0001>

<llo_original>
// kernel: tpu_custom_call.1
$region0: #{tpu_custom_call.1}
  #allocation0 [shape = 'u32[]', space=smem, size = 0x4, offset = 0x4, fixed_abs, tag = 'smem constant byte address 0x4 - core index']
  #allocation1 [shape = 'u32[72,128]{1,0:T(1,128)}', space=vmem, size = 0x9000, scoped, tag = 'internal scratch']
  #allocation2 [shape = 'f32[1,128]{1,0:T(1,128)}', space=vmem, size = 0x200, scoped, tag = 'scratch operand']
  #allocation3 [shape = 'f32[1,128]{1,0:T(1,128)}', space=vmem, size = 0x200, scoped, tag = 'scratch operand']
  #allocation4 [shape = 'f32[1,128]{1,0:T(1,128)}', space=vmem, size = 0x200, scoped, tag = 'scratch operand']
  #allocation5 [shape = 'f32[1,128]{1,0:T(1,128)}', space=vmem, size = 0x200, scoped, tag = 'scratch operand']
  #allocation6 [shape = 'f32[1,1]{1,0:T(1,128)}', space=vmem, size = 0x200, scoped, tag = 'scratch operand']
  #allocation7 [shape = 'f32[128,128]{1,0:T(8,128)}', space=vmem, size = 0x10000, scoped, tag = 'scratch operand']
  #allocation8 [shape = 'f32[128,128]{1,0:T(8,128)}', space=vmem, size = 0x10000, scoped, tag = 'scratch operand']
  %s0 = inlined_call_operand.hbm [shape: f32[8,128], index: 0, kind: input, shape index: {}]
  %s1 = inlined_call_operand.hbm [shape: f32[8,128], index: 1, kind: input, shape index: {}]
  %s2 = inlined_call_operand.hbm [shape: f32[1,1], index: 2, kind: output, shape index: {}]
  %s3 = sld [smem:[#allocation0]]
  $region34: #{tpu_custom_call.1} parent=0
    _
  %s5 = ssub.s32 1, %s3
  %s6 = scalar_select 0, %s5, %s3
  $region1: #{tpu_custom_call.1} parent=0
    #allocation9 [shape = 'u8[4096]{0}', space=vmem, size = 0x1000, scoped, tag = 'input window, operand 0, single buffered']
    #allocation10 [shape = 's32[1]{0}', space=sflag, size = 0x4, scoped, tag = 'scoped memory for tpu_custom_call.1']
    #allocation11 [shape = 's32[1]{0}', space=sflag, size = 0x4, scoped, tag = 'scoped memory for tpu_custom_call.1']
    #allocation12 [shape = 'u8[4096]{0}', space=vmem, size = 0x1000, scoped, tag = 'input window, operand 1, single buffered']
    #allocation13 [shape = 's32[1]{0}', space=sflag, size = 0x4, scoped, tag = 'scoped memory for tpu_custom_call.1']
    #allocation14 [shape = 'u8[512]{0}', space=vmem, size = 0x400, scoped, tag = 'output window, operand 0, single buffered']
    %7 = vsyncpa [#allocation10], 0
    %8 = vsyncpa [#allocation13], 0
    %9 = vsyncpa [#allocation11], 0
    // Predicated region
    $region2: #{tpu_custom_call.1} parent=1 // pred_check
      _
    $region3: #{tpu_custom_call.1} parent=1 // pred_check_branch
      %11 = sbr.rel (0) target = $region5
    $region4: #{tpu_custom_call.1} parent=1 // pred_region
      %13 = vsyncadd [#allocation10], 0
      %s15 = sshll.u32 %s0, 4
      %s16 = int_to_ptr.hbm [resolvable:$true] %s15
      %s17 = sshll.u32 [#allocation9], 4
      %s18 = int_to_ptr.vmem [resolvable:$true] %s17
      %20 = dma.hbm_to_vmem [thread:$0]  %s16, 128, %s18, [#allocation10]
    $region5: #{tpu_custom_call.1} parent=1 // pred_fallthru
      _
    // Predicated region
    $region6: #{tpu_custom_call.1} parent=1 // pred_check
      _
    $region7: #{tpu_custom_call.1} parent=1 // pred_check_branch
      %22 = sbr.rel (0) target = $region9
    $region8: #{tpu_custom_call.1} parent=1 // pred_region
      %24 = vsyncadd [#allocation13], 0
      %s26 = sshll.u32 %s1, 4
      %s27 = int_to_ptr.hbm [resolvable:$true] %s26
      %s28 = sshll.u32 [#allocation12], 4
      %s29 = int_to_ptr.vmem [resolvable:$true] %s28
      %31 = dma.hbm_to_vmem [thread:$0]  %s27, 128, %s29, [#allocation13]
    $region9: #{tpu_custom_call.1} parent=1 // pred_fallthru
      _
    // Predicated region
    $region10: #{tpu_custom_call.1} parent=1 // pred_check
      _
    $region11: #{tpu_custom_call.1} parent=1 // pred_check_branch
      %33 = sbr.rel (0) target = $region13
    $region12: #{tpu_custom_call.1} parent=1 // pred_region
      %35 = dma.done [#allocation10], 128
    $region13: #{tpu_custom_call.1} parent=1 // pred_fallthru
      _
    // Predicated region
    $region14: #{tpu_custom_call.1} parent=1 // pred_check
      _
    $region15: #{tpu_custom_call.1} parent=1 // pred_check_branch
      %37 = sbr.rel (0) target = $region17
    $region16: #{tpu_custom_call.1} parent=1 // pred_region
      %39 = dma.done [#allocation13], 128
    $region17: #{tpu_custom_call.1} parent=1 // pred_fallthru
      _
    %p40 = scmp.eq.s32.totalorder 0, 0
    // Predicated region
    $region18: #{tpu_custom_call.1} parent=1 // pred_check
      %p41 = pneg %p40
    $region19: #{tpu_custom_call.1} parent=1 // pred_check_branch
      %43 = sbr.rel (%p41) target = $region21
    $region20: #{tpu_custom_call.1} parent=1 // pred_region
      %44 = vst [vmem:[#allocation2] sm:$0x1] 0.0
      %45 = vst [vmem:[#allocation3] sm:$0x1] 0.0
      %46 = vst [vmem:[#allocation4] sm:$0x1] 0.0
      %47 = vst [vmem:[#allocation5] sm:$0x1] 0.0
      %vm48 = vcmask 0
      %49 = vst.msk [vmem:[#allocation6] sm:$0x1] %vm48, 0.0
      %50 = vst [vmem:[#allocation7] sm:$0xff] 0.0
      %51 = vst [vmem:[#allocation7 + $0x8] sm:$0xff] 0.0
      %52 = vst [vmem:[#allocation7 + $0x10] sm:$0xff] 0.0
      %53 = vst [vmem:[#allocation7 + $0x18] sm:$0xff] 0.0
      %54 = vst [vmem:[#allocation7 + $0x20] sm:$0xff] 0.0
      %55 = vst [vmem:[#allocation7 + $0x28] sm:$0xff] 0.0
      %56 = vst [vmem:[#allocation7 + $0x30] sm:$0xff] 0.0
      %57 = vst [vmem:[#allocation7 + $0x38] sm:$0xff] 0.0
      %58 = vst [vmem:[#allocation7 + $0x40] sm:$0xff] 0.0
      %59 = vst [vmem:[#allocation7 + $0x48] sm:$0xff] 0.0
      %60 = vst [vmem:[#allocation7 + $0x50] sm:$0xff] 0.0
      %61 = vst [vmem:[#allocation7 + $0x58] sm:$0xff] 0.0
      %62 = vst [vmem:[#allocation7 + $0x60] sm:$0xff] 0.0
      %63 = vst [vmem:[#allocation7 + $0x68] sm:$0xff] 0.0
      %64 = vst [vmem:[#allocation7 + $0x70] sm:$0xff] 0.0
      %65 = vst [vmem:[#allocation7 + $0x78] sm:$0xff] 0.0
      %66 = vst [vmem:[#allocation8] sm:$0xff] 0.0
      %67 = vst [vmem:[#allocation8 + $0x8] sm:$0xff] 0.0
      %68 = vst [vmem:[#allocation8 + $0x10] sm:$0xff] 0.0
      %69 = vst [vmem:[#allocation8 + $0x18] sm:$0xff] 0.0
      %70 = vst [vmem:[#allocation8 + $0x20] sm:$0xff] 0.0
      %71 = vst [vmem:[#allocation8 + $0x28] sm:$0xff] 0.0
      %72 = vst [vmem:[#allocation8 + $0x30] sm:$0xff] 0.0
      %73 = vst [vmem:[#allocation8 + $0x38] sm:$0xff] 0.0
      %74 = vst [vmem:[#allocation8 + $0x40] sm:$0xff] 0.0
      %75 = vst [vmem:[#allocation8 + $0x48] sm:$0xff] 0.0
      %76 = vst [vmem:[#allocation8 + $0x50] sm:$0xff] 0.0
      %77 = vst [vmem:[#allocation8 + $0x58] sm:$0xff] 0.0
      %78 = vst [vmem:[#allocation8 + $0x60] sm:$0xff] 0.0
      %79 = vst [vmem:[#allocation8 + $0x68] sm:$0xff] 0.0
      %80 = vst [vmem:[#allocation8 + $0x70] sm:$0xff] 0.0
      %81 = vst [vmem:[#allocation8 + $0x78] sm:$0xff] 0.0
    $region21: #{tpu_custom_call.1} parent=1 // pred_fallthru
      _
    %v82 = vld [vmem:[#allocation9] sm:$0xff]
    %v83 = vld [vmem:[#allocation12] sm:$0xff]
    %v84 = vld [vmem:[#allocation2] sm:$0x1]
    %v85 = vrot.slane %v82, 4
    %v86 = vadd.f32 %v82, %v85
    %v87 = vrot.slane %v86, 2
    %v88 = vadd.f32 %v86, %v87
    %v89 = vrot.slane %v88, 1
    %v90 = vadd.f32 %v88, %v89
    %v91 = vadd.f32 %v84, %v90
    %92 = vst [vmem:[#allocation2] sm:$0x1] %v91
    %v93 = vld [vmem:[#allocation3] sm:$0x1]
    %v94 = vrot.slane %v83, 4
    %v95 = vadd.f32 %v83, %v94
    %v96 = vrot.slane %v95, 2
    %v97 = vadd.f32 %v95, %v96
    %v98 = vrot.slane %v97, 1
    %v99 = vadd.f32 %v97, %v98
    %v100 = vadd.f32 %v93, %v99
    %101 = vst [vmem:[#allocation3] sm:$0x1] %v100
    %v102 = vld [vmem:[#allocation4] sm:$0x1]
    %v103 = vmul.f32 %v82, %v82
    %v104 = vrot.slane %v103, 4
    %v105 = vadd.f32 %v103, %v104
    %v106 = vrot.slane %v105, 2
    %v107 = vadd.f32 %v105, %v106
    %v108 = vrot.slane %v107, 1
    %v109 = vadd.f32 %v107, %v108
    %v110 = vadd.f32 %v102, %v109
    %111 = vst [vmem:[#allocation4] sm:$0x1] %v110
    %v112 = vld [vmem:[#allocation5] sm:$0x1]
    %v113 = vmul.f32 %v83, %v83
    %v114 = vrot.slane %v113, 4
    %v115 = vadd.f32 %v113, %v114
    %v116 = vrot.slane %v115, 2
    %v117 = vadd.f32 %v115, %v116
    %v118 = vrot.slane %v117, 1
    %v119 = vadd.f32 %v117, %v118
    %v120 = vadd.f32 %v112, %v119
    %121 = vst [vmem:[#allocation5] sm:$0x1] %v120
    %v122 = vsub.f32 %v82, %v83
    %v123 = vld [vmem:[#allocation6] sm:$0x1]
    %v124 = vmul.f32 %v122, %v122
    %125 = vadd.xlane.f32.xlu0 %v124
    %v126 = vpop.xlane.xlu0 %125
    %v127 = vrot.slane %v126, 4
    %v128 = vadd.f32 %v126, %v127
    %v129 = vrot.slane %v128, 2
    %v130 = vadd.f32 %v128, %v129
    %v131 = vrot.slane %v130, 1
    %v132 = vadd.f32 %v130, %v131
    %s133 = vtos %v132
    %v134 = vstv %s133
    %v135 = vadd.f32 %v123, %v134
    %vm136 = vcmask 0
    %137 = vst.msk [vmem:[#allocation6] sm:$0x1] %vm136, %v135
    %v138 = vld [vmem:[#allocation7] sm:$0xff]
    %v139 = vld [vmem:[#allocation7 + $0x8] sm:$0xff]
    %v140 = vld [vmem:[#allocation7 + $0x10] sm:$0xff]
    %v141 = vld [vmem:[#allocation7 + $0x18] sm:$0xff]
    %v142 = vld [vmem:[#allocation7 + $0x20] sm:$0xff]
    %v143 = vld [vmem:[#allocation7 + $0x28] sm:$0xff]
    %v144 = vld [vmem:[#allocation7 + $0x30] sm:$0xff]
    %v145 = vld [vmem:[#allocation7 + $0x38] sm:$0xff]
    %v146 = vld [vmem:[#allocation7 + $0x40] sm:$0xff]
    %v147 = vld [vmem:[#allocation7 + $0x48] sm:$0xff]
    %v148 = vld [vmem:[#allocation7 + $0x50] sm:$0xff]
    %v149 = vld [vmem:[#allocation7 + $0x58] sm:$0xff]
    %v150 = vld [vmem:[#allocation7 + $0x60] sm:$0xff]
    %v151 = vld [vmem:[#allocation7 + $0x68] sm:$0xff]
    %v152 = vld [vmem:[#allocation7 + $0x70] sm:$0xff]
    %v153 = vld [vmem:[#allocation7 + $0x78] sm:$0xff]
    %154 = vxpose.xlu0.b32.start [1/16] %v82, 128
    %155 = vxpose.xlu0.b32.cont [2/16] 0.0, 128
    %156 = vxpose.xlu0.b32.cont [3/16] 0.0, 128
    %157 = vxpose.xlu0.b32.cont [4/16] 0.0, 128
    %158 = vxpose.xlu0.b32.cont [5/16] 0.0, 128
    %159 = vxpose.xlu0.b32.cont [6/16] 0.0, 128
    %160 = vxpose.xlu0.b32.cont [7/16] 0.0, 128
    %161 = vxpose.xlu0.b32.cont [8/16] 0.0, 128
    %162 = vxpose.xlu0.b32.cont [9/16] 0.0, 128
    %163 = vxpose.xlu0.b32.cont [10/16] 0.0, 128
    %164 = vxpose.xlu0.b32.cont [11/16] 0.0, 128
    %165 = vxpose.xlu0.b32.cont [12/16] 0.0, 128
    %166 = vxpose.xlu0.b32.cont [13/16] 0.0, 128
    %167 = vxpose.xlu0.b32.cont [14/16] 0.0, 128
    %168 = vxpose.xlu0.b32.cont [15/16] 0.0, 128
    %169 = vxpose.xlu0.b32.end [16/16] 0.0, 128
    %v170 = vpop.trf.xlu0
    %v171 = vpop.trf.xlu0
    %v172 = vpop.trf.xlu0
    %v173 = vpop.trf.xlu0
    %v174 = vpop.trf.xlu0
    %v175 = vpop.trf.xlu0
    %v176 = vpop.trf.xlu0
    %v177 = vpop.trf.xlu0
    %v178 = vpop.trf.xlu0
    %v179 = vpop.trf.xlu0
    %v180 = vpop.trf.xlu0
    %v181 = vpop.trf.xlu0
    %v182 = vpop.trf.xlu0
    %v183 = vpop.trf.xlu0
    %v184 = vpop.trf.xlu0
    %v185 = vpop.trf.xlu0
    %vm186 = vcmask 64512
    %v188 = vsel %vm186, %v170, 0
    %v191 = vsel %vm186, %v171, 0
    %v194 = vsel %vm186, %v172, 0
    %v197 = vsel %vm186, %v173, 0
    %v200 = vsel %vm186, %v174, 0
    %v203 = vsel %vm186, %v175, 0
    %v206 = vsel %vm186, %v176, 0
    %v209 = vsel %vm186, %v177, 0
    %v212 = vsel %vm186, %v178, 0
    %v215 = vsel %vm186, %v179, 0
    %v218 = vsel %vm186, %v180, 0
    %v221 = vsel %vm186, %v181, 0
    %v224 = vsel %vm186, %v182, 0
    %v227 = vsel %vm186, %v183, 0
    %v230 = vsel %vm186, %v184, 0
    %v233 = vsel %vm186, %v185, 0
    %235 = vmatpush.msra.mxu0 0.0
    %236 = vmatpush.msra.mxu0 0.0
    %237 = vmatpush.msra.mxu0 0.0
    %238 = vmatpush.msra.mxu0 0.0
    %239 = vmatpush.msra.mxu0 0.0
    %240 = vmatpush.msra.mxu0 0.0
    %241 = vmatpush.msra.mxu0 0.0
    %242 = vmatpush.msra.mxu0 0.0
    %243 = vmatpush.msra.mxu0 0.0
    %244 = vmatpush.msra.mxu0 0.0
    %245 = vmatpush.msra.mxu0 0.0
    %246 = vmatpush.msra.mxu0 0.0
    %247 = vmatpush.msra.mxu0 0.0
    %248 = vmatpush.msra.mxu0 0.0
    %249 = vmatpush.msra.mxu0 0.0
    %250 = vmatpush.msra.mxu0 %v82
    %251 = vmatmul.f32.gmra.mxu0 %v188
    %v252 = vpop.f32.mrf.mxu0
    %v253 = vadd.f32 0.0, %v252
    %254 = vmatmul.f32.gmra.mxu0 %v191
    %v255 = vpop.f32.mrf.mxu0
    %v256 = vadd.f32 0.0, %v255
    %257 = vmatmul.f32.gmra.mxu0 %v194
    %v258 = vpop.f32.mrf.mxu0
    %v259 = vadd.f32 0.0, %v258
    %260 = vmatmul.f32.gmra.mxu0 %v197
    %v261 = vpop.f32.mrf.mxu0
    %v262 = vadd.f32 0.0, %v261
    %263 = vmatmul.f32.gmra.mxu0 %v200
    %v264 = vpop.f32.mrf.mxu0
    %v265 = vadd.f32 0.0, %v264
    %266 = vmatmul.f32.gmra.mxu0 %v203
    %v267 = vpop.f32.mrf.mxu0
    %v268 = vadd.f32 0.0, %v267
    %269 = vmatmul.f32.gmra.mxu0 %v206
    %v270 = vpop.f32.mrf.mxu0
    %v271 = vadd.f32 0.0, %v270
    %272 = vmatmul.f32.gmra.mxu0 %v209
    %v273 = vpop.f32.mrf.mxu0
    %v274 = vadd.f32 0.0, %v273
    %275 = vmatmul.f32.gmra.mxu0 %v212
    %v276 = vpop.f32.mrf.mxu0
    %v277 = vadd.f32 0.0, %v276
    %278 = vmatmul.f32.gmra.mxu0 %v215
    %v279 = vpop.f32.mrf.mxu0
    %v280 = vadd.f32 0.0, %v279
    %281 = vmatmul.f32.gmra.mxu0 %v218
    %v282 = vpop.f32.mrf.mxu0
    %v283 = vadd.f32 0.0, %v282
    %284 = vmatmul.f32.gmra.mxu0 %v221
    %v285 = vpop.f32.mrf.mxu0
    %v286 = vadd.f32 0.0, %v285
    %287 = vmatmul.f32.gmra.mxu0 %v224
    %v288 = vpop.f32.mrf.mxu0
    %v289 = vadd.f32 0.0, %v288
    %290 = vmatmul.f32.gmra.mxu0 %v227
    %v291 = vpop.f32.mrf.mxu0
    %v292 = vadd.f32 0.0, %v291
    %293 = vmatmul.f32.gmra.mxu0 %v230
    %v294 = vpop.f32.mrf.mxu0
    %v295 = vadd.f32 0.0, %v294
    %296 = vmatmul.f32.gmra.mxu0 %v233
    %v297 = vpop.f32.mrf.mxu0
    %v298 = vadd.f32 0.0, %v297
    %299 = vdwg.mxu0
    %v300 = vadd.f32 %v138, %v253
    %v301 = vadd.f32 %v139, %v256
    %v302 = vadd.f32 %v140, %v259
    %v303 = vadd.f32 %v141, %v262
    %v304 = vadd.f32 %v142, %v265
    %v305 = vadd.f32 %v143, %v268
    %v306 = vadd.f32 %v144, %v271
    %v307 = vadd.f32 %v145, %v274
    %v308 = vadd.f32 %v146, %v277
    %v309 = vadd.f32 %v147, %v280
    %v310 = vadd.f32 %v148, %v283
    %v311 = vadd.f32 %v149, %v286
    %v312 = vadd.f32 %v150, %v289
    %v313 = vadd.f32 %v151, %v292
    %v314 = vadd.f32 %v152, %v295
    %v315 = vadd.f32 %v153, %v298
    %316 = vst [vmem:[#allocation7] sm:$0xff] %v300
    %317 = vst [vmem:[#allocation7 + $0x8] sm:$0xff] %v301
    %318 = vst [vmem:[#allocation7 + $0x10] sm:$0xff] %v302
    %319 = vst [vmem:[#allocation7 + $0x18] sm:$0xff] %v303
    %320 = vst [vmem:[#allocation7 + $0x20] sm:$0xff] %v304
    %321 = vst [vmem:[#allocation7 + $0x28] sm:$0xff] %v305
    %322 = vst [vmem:[#allocation7 + $0x30] sm:$0xff] %v306
    %323 = vst [vmem:[#allocation7 + $0x38] sm:$0xff] %v307
    %324 = vst [vmem:[#allocation7 + $0x40] sm:$0xff] %v308
    %325 = vst [vmem:[#allocation7 + $0x48] sm:$0xff] %v309
    %326 = vst [vmem:[#allocation7 + $0x50] sm:$0xff] %v310
    %327 = vst [vmem:[#allocation7 + $0x58] sm:$0xff] %v311
    %328 = vst [vmem:[#allocation7 + $0x60] sm:$0xff] %v312
    %329 = vst [vmem:[#allocation7 + $0x68] sm:$0xff] %v313
    %330 = vst [vmem:[#allocation7 + $0x70] sm:$0xff] %v314
    %331 = vst [vmem:[#allocation7 + $0x78] sm:$0xff] %v315
    %v332 = vld [vmem:[#allocation8] sm:$0xff]
    %v333 = vld [vmem:[#allocation8 + $0x8] sm:$0xff]
    %v334 = vld [vmem:[#allocation8 + $0x10] sm:$0xff]
    %v335 = vld [vmem:[#allocation8 + $0x18] sm:$0xff]
    %v336 = vld [vmem:[#allocation8 + $0x20] sm:$0xff]
    %v337 = vld [vmem:[#allocation8 + $0x28] sm:$0xff]
    %v338 = vld [vmem:[#allocation8 + $0x30] sm:$0xff]
    %v339 = vld [vmem:[#allocation8 + $0x38] sm:$0xff]
    %v340 = vld [vmem:[#allocation8 + $0x40] sm:$0xff]
    %v341 = vld [vmem:[#allocation8 + $0x48] sm:$0xff]
    %v342 = vld [vmem:[#allocation8 + $0x50] sm:$0xff]
    %v343 = vld [vmem:[#allocation8 + $0x58] sm:$0xff]
    %v344 = vld [vmem:[#allocation8 + $0x60] sm:$0xff]
    %v345 = vld [vmem:[#allocation8 + $0x68] sm:$0xff]
    %v346 = vld [vmem:[#allocation8 + $0x70] sm:$0xff]
    %v347 = vld [vmem:[#allocation8 + $0x78] sm:$0xff]
    %348 = vxpose.xlu0.b32.start [1/16] %v83, 128
    %349 = vxpose.xlu0.b32.cont [2/16] 0.0, 128
    %350 = vxpose.xlu0.b32.cont [3/16] 0.0, 128
    %351 = vxpose.xlu0.b32.cont [4/16] 0.0, 128
    %352 = vxpose.xlu0.b32.cont [5/16] 0.0, 128
    %353 = vxpose.xlu0.b32.cont [6/16] 0.0, 128
    %354 = vxpose.xlu0.b32.cont [7/16] 0.0, 128
    %355 = vxpose.xlu0.b32.cont [8/16] 0.0, 128
    %356 = vxpose.xlu0.b32.cont [9/16] 0.0, 128
    %357 = vxpose.xlu0.b32.cont [10/16] 0.0, 128
    %358 = vxpose.xlu0.b32.cont [11/16] 0.0, 128
    %359 = vxpose.xlu0.b32.cont [12/16] 0.0, 128
    %360 = vxpose.xlu0.b32.cont [13/16] 0.0, 128
    %361 = vxpose.xlu0.b32.cont [14/16] 0.0, 128
    %362 = vxpose.xlu0.b32.cont [15/16] 0.0, 128
    %363 = vxpose.xlu0.b32.end [16/16] 0.0, 128
    %v364 = vpop.trf.xlu0
    %v365 = vpop.trf.xlu0
    %v366 = vpop.trf.xlu0
    %v367 = vpop.trf.xlu0
    %v368 = vpop.trf.xlu0
    %v369 = vpop.trf.xlu0
    %v370 = vpop.trf.xlu0
    %v371 = vpop.trf.xlu0
    %v372 = vpop.trf.xlu0
    %v373 = vpop.trf.xlu0
    %v374 = vpop.trf.xlu0
    %v375 = vpop.trf.xlu0
    %v376 = vpop.trf.xlu0
    %v377 = vpop.trf.xlu0
    %v378 = vpop.trf.xlu0
    %v379 = vpop.trf.xlu0
    %v381 = vsel %vm186, %v364, 0
    %v384 = vsel %vm186, %v365, 0
    %v387 = vsel %vm186, %v366, 0
    %v390 = vsel %vm186, %v367, 0
    %v393 = vsel %vm186, %v368, 0
    %v396 = vsel %vm186, %v369, 0
    %v399 = vsel %vm186, %v370, 0
    %v402 = vsel %vm186, %v371, 0
    %v405 = vsel %vm186, %v372, 0
    %v408 = vsel %vm186, %v373, 0
    %v411 = vsel %vm186, %v374, 0
    %v414 = vsel %vm186, %v375, 0
    %v417 = vsel %vm186, %v376, 0
    %v420 = vsel %vm186, %v377, 0
    %v423 = vsel %vm186, %v378, 0
    %v426 = vsel %vm186, %v379, 0
    %428 = vmatpush.msra.mxu0 0.0
    %429 = vmatpush.msra.mxu0 0.0
    %430 = vmatpush.msra.mxu0 0.0
    %431 = vmatpush.msra.mxu0 0.0
    %432 = vmatpush.msra.mxu0 0.0
    %433 = vmatpush.msra.mxu0 0.0
    %434 = vmatpush.msra.mxu0 0.0
    %435 = vmatpush.msra.mxu0 0.0
    %436 = vmatpush.msra.mxu0 0.0
    %437 = vmatpush.msra.mxu0 0.0
    %438 = vmatpush.msra.mxu0 0.0
    %439 = vmatpush.msra.mxu0 0.0
    %440 = vmatpush.msra.mxu0 0.0
    %441 = vmatpush.msra.mxu0 0.0
    %442 = vmatpush.msra.mxu0 0.0
    %443 = vmatpush.msra.mxu0 %v83
    %444 = vmatmul.f32.gmra.mxu0 %v381
    %v445 = vpop.f32.mrf.mxu0
    %v446 = vadd.f32 0.0, %v445
    %447 = vmatmul.f32.gmra.mxu0 %v384
    %v448 = vpop.f32.mrf.mxu0
    %v449 = vadd.f32 0.0, %v448
    %450 = vmatmul.f32.gmra.mxu0 %v387
    %v451 = vpop.f32.mrf.mxu0
    %v452 = vadd.f32 0.0, %v451
    %453 = vmatmul.f32.gmra.mxu0 %v390
    %v454 = vpop.f32.mrf.mxu0
    %v455 = vadd.f32 0.0, %v454
    %456 = vmatmul.f32.gmra.mxu0 %v393
    %v457 = vpop.f32.mrf.mxu0
    %v458 = vadd.f32 0.0, %v457
    %459 = vmatmul.f32.gmra.mxu0 %v396
    %v460 = vpop.f32.mrf.mxu0
    %v461 = vadd.f32 0.0, %v460
    %462 = vmatmul.f32.gmra.mxu0 %v399
    %v463 = vpop.f32.mrf.mxu0
    %v464 = vadd.f32 0.0, %v463
    %465 = vmatmul.f32.gmra.mxu0 %v402
    %v466 = vpop.f32.mrf.mxu0
    %v467 = vadd.f32 0.0, %v466
    %468 = vmatmul.f32.gmra.mxu0 %v405
    %v469 = vpop.f32.mrf.mxu0
    %v470 = vadd.f32 0.0, %v469
    %471 = vmatmul.f32.gmra.mxu0 %v408
    %v472 = vpop.f32.mrf.mxu0
    %v473 = vadd.f32 0.0, %v472
    %474 = vmatmul.f32.gmra.mxu0 %v411
    %v475 = vpop.f32.mrf.mxu0
    %v476 = vadd.f32 0.0, %v475
    %477 = vmatmul.f32.gmra.mxu0 %v414
    %v478 = vpop.f32.mrf.mxu0
    %v479 = vadd.f32 0.0, %v478
    %480 = vmatmul.f32.gmra.mxu0 %v417
    %v481 = vpop.f32.mrf.mxu0
    %v482 = vadd.f32 0.0, %v481
    %483 = vmatmul.f32.gmra.mxu0 %v420
    %v484 = vpop.f32.mrf.mxu0
    %v485 = vadd.f32 0.0, %v484
    %486 = vmatmul.f32.gmra.mxu0 %v423
    %v487 = vpop.f32.mrf.mxu0
    %v488 = vadd.f32 0.0, %v487
    %489 = vmatmul.f32.gmra.mxu0 %v426
    %v490 = vpop.f32.mrf.mxu0
    %v491 = vadd.f32 0.0, %v490
    %492 = vdwg.mxu0
    %v493 = vadd.f32 %v332, %v446
    %v494 = vadd.f32 %v333, %v449
    %v495 = vadd.f32 %v334, %v452
    %v496 = vadd.f32 %v335, %v455
    %v497 = vadd.f32 %v336, %v458
    %v498 = vadd.f32 %v337, %v461
    %v499 = vadd.f32 %v338, %v464
    %v500 = vadd.f32 %v339, %v467
    %v501 = vadd.f32 %v340, %v470
    %v502 = vadd.f32 %v341, %v473
    %v503 = vadd.f32 %v342, %v476
    %v504 = vadd.f32 %v343, %v479
    %v505 = vadd.f32 %v344, %v482
    %v506 = vadd.f32 %v345, %v485
    %v507 = vadd.f32 %v346, %v488
    %v508 = vadd.f32 %v347, %v491
    %509 = vst [vmem:[#allocation8] sm:$0xff] %v493
    %510 = vst [vmem:[#allocation8 + $0x8] sm:$0xff] %v494
    %511 = vst [vmem:[#allocation8 + $0x10] sm:$0xff] %v495
    %512 = vst [vmem:[#allocation8 + $0x18] sm:$0xff] %v496
    %513 = vst [vmem:[#allocation8 + $0x20] sm:$0xff] %v497
    %514 = vst [vmem:[#allocation8 + $0x28] sm:$0xff] %v498
    %515 = vst [vmem:[#allocation8 + $0x30] sm:$0xff] %v499
    %516 = vst [vmem:[#allocation8 + $0x38] sm:$0xff] %v500
    %517 = vst [vmem:[#allocation8 + $0x40] sm:$0xff] %v501
    %518 = vst [vmem:[#allocation8 + $0x48] sm:$0xff] %v502
    %519 = vst [vmem:[#allocation8 + $0x50] sm:$0xff] %v503
    %520 = vst [vmem:[#allocation8 + $0x58] sm:$0xff] %v504
    %521 = vst [vmem:[#allocation8 + $0x60] sm:$0xff] %v505
    %522 = vst [vmem:[#allocation8 + $0x68] sm:$0xff] %v506
    %523 = vst [vmem:[#allocation8 + $0x70] sm:$0xff] %v507
    %524 = vst [vmem:[#allocation8 + $0x78] sm:$0xff] %v508
    // Predicated region
    $region22: #{tpu_custom_call.1} parent=1 // pred_check
      %p525 = pneg %p40
    $region23: #{tpu_custom_call.1} parent=1 // pred_check_branch
      %527 = sbr.rel (%p525) target = $region25
    $region24: #{tpu_custom_call.1} parent=1 // pred_region
      %v528 = vld [vmem:[#allocation2] sm:$0x1]
      %v529 = vld [vmem:[#allocation3] sm:$0x1]
      %v530 = vld [vmem:[#allocation4] sm:$0x1]
      %v531 = vmul.f32 %v528, %v528
      %v532 = vrcp.pop 8.0
      %v533 = vmul.f32 8.0, %v532
      %v534 = vsub.f32 1.0, %v533
      %v535 = vmul.f32 %v532, %v534
      %v536 = vadd.f32 %v532, %v535
      %vm537 = vweird.f32 %v532
      %v538 = vsel %vm537, %v532, %v536
      %v539 = vmul.f32 %v531, %v538
      %v540 = vsub.f32 %v530, %v539
      %v541 = vmul.f32 %v540, 0.14285715
      %v542 = vld [vmem:[#allocation5] sm:$0x1]
      %v543 = vmul.f32 %v529, %v529
      %v544 = vmul.f32 %v543, %v538
      %v545 = vsub.f32 %v542, %v544
      %v546 = vmul.f32 %v545, 0.14285715
      %v547 = vlaneseq
      %v548 = vand.u32 %v547, 127
      %vm549 = vcmp.lt.s32.totalorder %v548, 32
      %v550 = vadd.f32 %v541, 0.0001
      %v551 = vrsqrt.pop %v550
      %v552 = vmul.f32 %v551, %v550
      %v553 = vmul.f32 %v552, %v551
      %v554 = vmul.f32 0.5, %v553
      %v555 = vsub.f32 1.5, %v554
      %v556 = vmul.f32 %v551, %v555
      %v557 = vmul.f32 %v550, %v556
      %vm558 = vcmp.eq.f32.partialorder %v550, inf
      %v559 = vsel %vm558, %v550, %v557
      %vm560 = vcmp.eq.f32.partialorder %v550, 0.0
      %v561 = vand.u32 %v550, 2147483648
      %v562 = vsel %vm560, %v561, %v559
      %v563 = vadd.f32 %v546, 0.0001
      %v564 = vrsqrt.pop %v563
      %v565 = vmul.f32 %v564, %v563
      %v566 = vmul.f32 %v565, %v564
      %v567 = vmul.f32 0.5, %v566
      %v568 = vsub.f32 1.5, %v567
      %v569 = vmul.f32 %v564, %v568
      %v570 = vmul.f32 %v563, %v569
      %vm571 = vcmp.eq.f32.partialorder %v563, inf
      %v572 = vsel %vm571, %v563, %v570
      %vm573 = vcmp.eq.f32.partialorder %v563, 0.0
      %v574 = vand.u32 %v563, 2147483648
      %v575 = vsel %vm573, %v574, %v572
      %v576 = vsub.f32 1.0, %v562
      %v577 = vmax.f32 %v576, 0.0
      %v578 = vsel %vm549, %v577, 0.0
      %vm579 = vcmask 1040384
      %v580 = vsel %vm579, %v578, 0.0
      %581 = vadd.xlane.f32.xlu0 %v580
      %v582 = vpop.xlane.xlu0 %581
      %v583 = vrot.slane %v582, 4
      %v584 = vadd.f32 %v582, %v583
      %v585 = vrot.slane %v584, 2
      %v586 = vadd.f32 %v584, %v585
      %v587 = vrot.slane %v586, 1
      %v588 = vadd.f32 %v586, %v587
      %s589 = vtos %v588
      %v590 = vsub.f32 1.0, %v575
      %v591 = vmax.f32 %v590, 0.0
      %v592 = vsel %vm549, %v591, 0.0
      %v593 = vsel %vm579, %v592, 0.0
      %594 = vadd.xlane.f32.xlu0 %v593
      %v595 = vpop.xlane.xlu0 %594
      %v596 = vrot.slane %v595, 4
      %v597 = vadd.f32 %v595, %v596
      %v598 = vrot.slane %v597, 2
      %v599 = vadd.f32 %v597, %v598
      %v600 = vrot.slane %v599, 1
      %v601 = vadd.f32 %v599, %v600
      %s602 = vtos %v601
      %s603 = sadd.f32 %s589, %s602
      %s604 = smul.f32 %s603, 0.03125
      %v605 = vld [vmem:[#allocation6] sm:$0x1]
      %v606 = vmul.f32 %v605, 0.00390625
      %v607 = vld [vmem:[#allocation7] sm:$0xff]
      %v608 = vld [vmem:[#allocation7 + $0x8] sm:$0xff]
      %v609 = vld [vmem:[#allocation7 + $0x10] sm:$0xff]
      %v610 = vld [vmem:[#allocation7 + $0x18] sm:$0xff]
      %v611 = vld [vmem:[#allocation7 + $0x20] sm:$0xff]
      %v612 = vld [vmem:[#allocation7 + $0x28] sm:$0xff]
      %v613 = vld [vmem:[#allocation7 + $0x30] sm:$0xff]
      %v614 = vld [vmem:[#allocation7 + $0x38] sm:$0xff]
      %v615 = vld [vmem:[#allocation7 + $0x40] sm:$0xff]
      %v616 = vld [vmem:[#allocation7 + $0x48] sm:$0xff]
      %v617 = vld [vmem:[#allocation7 + $0x50] sm:$0xff]
      %v618 = vld [vmem:[#allocation7 + $0x58] sm:$0xff]
      %v619 = vld [vmem:[#allocation7 + $0x60] sm:$0xff]
      %v620 = vld [vmem:[#allocation7 + $0x68] sm:$0xff]
      %v621 = vld [vmem:[#allocation7 + $0x70] sm:$0xff]
      %v622 = vld [vmem:[#allocation7 + $0x78] sm:$0xff]
      %623 = vxpose.xlu0.b32.start [1/16] %v528, 128
      %624 = vxpose.xlu0.b32.cont [2/16] 0.0, 128
      %625 = vxpose.xlu0.b32.cont [3/16] 0.0, 128
      %626 = vxpose.xlu0.b32.cont [4/16] 0.0, 128
      %627 = vxpose.xlu0.b32.cont [5/16] 0.0, 128
      %628 = vxpose.xlu0.b32.cont [6/16] 0.0, 128
      %629 = vxpose.xlu0.b32.cont [7/16] 0.0, 128
      %630 = vxpose.xlu0.b32.cont [8/16] 0.0, 128
      %631 = vxpose.xlu0.b32.cont [9/16] 0.0, 128
      %632 = vxpose.xlu0.b32.cont [10/16] 0.0, 128
      %633 = vxpose.xlu0.b32.cont [11/16] 0.0, 128
      %634 = vxpose.xlu0.b32.cont [12/16] 0.0, 128
      %635 = vxpose.xlu0.b32.cont [13/16] 0.0, 128
      %636 = vxpose.xlu0.b32.cont [14/16] 0.0, 128
      %637 = vxpose.xlu0.b32.cont [15/16] 0.0, 128
      %638 = vxpose.xlu0.b32.end [16/16] 0.0, 128
      %v639 = vpop.trf.xlu0
      %v640 = vpop.trf.xlu0
      %v641 = vpop.trf.xlu0
      %v642 = vpop.trf.xlu0
      %v643 = vpop.trf.xlu0
      %v644 = vpop.trf.xlu0
      %v645 = vpop.trf.xlu0
      %v646 = vpop.trf.xlu0
      %v647 = vpop.trf.xlu0
      %v648 = vpop.trf.xlu0
      %v649 = vpop.trf.xlu0
      %v650 = vpop.trf.xlu0
      %v651 = vpop.trf.xlu0
      %v652 = vpop.trf.xlu0
      %v653 = vpop.trf.xlu0
      %v654 = vpop.trf.xlu0
      %vm655 = vcmask 7168
      %v657 = vsel %vm655, %v639, 0
      %v660 = vsel %vm655, %v640, 0
      %v663 = vsel %vm655, %v641, 0
      %v666 = vsel %vm655, %v642, 0
      %v669 = vsel %vm655, %v643, 0
      %v672 = vsel %vm655, %v644, 0
      %v675 = vsel %vm655, %v645, 0
      %v678 = vsel %vm655, %v646, 0
      %v681 = vsel %vm655, %v647, 0
      %v684 = vsel %vm655, %v648, 0
      %v687 = vsel %vm655, %v649, 0
      %v690 = vsel %vm655, %v650, 0
      %v693 = vsel %vm655, %v651, 0
      %v696 = vsel %vm655, %v652, 0
      %v699 = vsel %vm655, %v653, 0
      %v702 = vsel %vm655, %v654, 0
      %v705 = vsel %vm579, %v528, 0
      %707 = vmatpush.msra.mxu0 0.0
      %708 = vmatpush.msra.mxu0 0.0
      %709 = vmatpush.msra.mxu0 0.0
      %710 = vmatpush.msra.mxu0 0.0
      %711 = vmatpush.msra.mxu0 0.0
      %712 = vmatpush.msra.mxu0 0.0
      %713 = vmatpush.msra.mxu0 0.0
      %714 = vmatpush.msra.mxu0 0.0
      %715 = vmatpush.msra.mxu0 0.0
      %716 = vmatpush.msra.mxu0 0.0
      %717 = vmatpush.msra.mxu0 0.0
      %718 = vmatpush.msra.mxu0 0.0
      %719 = vmatpush.msra.mxu0 0.0
      %720 = vmatpush.msra.mxu0 0.0
      %721 = vmatpush.msra.mxu0 0.0
      %722 = vmatpush.msra.mxu0 %v705
      %723 = vmatmul.f32.gmra.mxu0 %v657
      %v724 = vpop.f32.mrf.mxu0
      %v725 = vadd.f32 0.0, %v724
      %726 = vmatmul.f32.gmra.mxu0 %v660
      %v727 = vpop.f32.mrf.mxu0
      %v728 = vadd.f32 0.0, %v727
      %729 = vmatmul.f32.gmra.mxu0 %v663
      %v730 = vpop.f32.mrf.mxu0
      %v731 = vadd.f32 0.0, %v730
      %732 = vmatmul.f32.gmra.mxu0 %v666
      %v733 = vpop.f32.mrf.mxu0
      %v734 = vadd.f32 0.0, %v733
      %735 = vmatmul.f32.gmra.mxu0 %v669
      %v736 = vpop.f32.mrf.mxu0
      %v737 = vadd.f32 0.0, %v736
      %738 = vmatmul.f32.gmra.mxu0 %v672
      %v739 = vpop.f32.mrf.mxu0
      %v740 = vadd.f32 0.0, %v739
      %741 = vmatmul.f32.gmra.mxu0 %v675
      %v742 = vpop.f32.mrf.mxu0
      %v743 = vadd.f32 0.0, %v742
      %744 = vmatmul.f32.gmra.mxu0 %v678
      %v745 = vpop.f32.mrf.mxu0
      %v746 = vadd.f32 0.0, %v745
      %747 = vmatmul.f32.gmra.mxu0 %v681
      %v748 = vpop.f32.mrf.mxu0
      %v749 = vadd.f32 0.0, %v748
      %750 = vmatmul.f32.gmra.mxu0 %v684
      %v751 = vpop.f32.mrf.mxu0
      %v752 = vadd.f32 0.0, %v751
      %753 = vmatmul.f32.gmra.mxu0 %v687
      %v754 = vpop.f32.mrf.mxu0
      %v755 = vadd.f32 0.0, %v754
      %756 = vmatmul.f32.gmra.mxu0 %v690
      %v757 = vpop.f32.mrf.mxu0
      %v758 = vadd.f32 0.0, %v757
      %759 = vmatmul.f32.gmra.mxu0 %v693
      %v760 = vpop.f32.mrf.mxu0
      %v761 = vadd.f32 0.0, %v760
      %762 = vmatmul.f32.gmra.mxu0 %v696
      %v763 = vpop.f32.mrf.mxu0
      %v764 = vadd.f32 0.0, %v763
      %765 = vmatmul.f32.gmra.mxu0 %v699
      %v766 = vpop.f32.mrf.mxu0
      %v767 = vadd.f32 0.0, %v766
      %768 = vmatmul.f32.gmra.mxu0 %v702
      %v769 = vpop.f32.mrf.mxu0
      %v770 = vadd.f32 0.0, %v769
      %771 = vdwg.mxu0
      %v772 = vmul.f32 %v725, %v538
      %v773 = vmul.f32 %v728, %v538
      %v774 = vmul.f32 %v731, %v538
      %v775 = vmul.f32 %v734, %v538
      %v776 = vmul.f32 %v737, %v538
      %v777 = vmul.f32 %v740, %v538
      %v778 = vmul.f32 %v743, %v538
      %v779 = vmul.f32 %v746, %v538
      %v780 = vmul.f32 %v749, %v538
      %v781 = vmul.f32 %v752, %v538
      %v782 = vmul.f32 %v755, %v538
      %v783 = vmul.f32 %v758, %v538
      %v784 = vmul.f32 %v761, %v538
      %v785 = vmul.f32 %v764, %v538
      %v786 = vmul.f32 %v767, %v538
      %v787 = vmul.f32 %v770, %v538
      %v788 = vsub.f32 %v607, %v772
      %v789 = vsub.f32 %v608, %v773
      %v790 = vsub.f32 %v609, %v774
      %v791 = vsub.f32 %v610, %v775
      %v792 = vsub.f32 %v611, %v776
      %v793 = vsub.f32 %v612, %v777
      %v794 = vsub.f32 %v613, %v778
      %v795 = vsub.f32 %v614, %v779
      %v796 = vsub.f32 %v615, %v780
      %v797 = vsub.f32 %v616, %v781
      %v798 = vsub.f32 %v617, %v782
      %v799 = vsub.f32 %v618, %v783
      %v800 = vsub.f32 %v619, %v784
      %v801 = vsub.f32 %v620, %v785
      %v802 = vsub.f32 %v621, %v786
      %v803 = vsub.f32 %v622, %v787
      %v804 = vmul.f32 %v788, 0.14285715
      %v805 = vmul.f32 %v789, 0.14285715
      %v806 = vmul.f32 %v790, 0.14285715
      %v807 = vmul.f32 %v791, 0.14285715
      %v808 = vmul.f32 %v792, 0.14285715
      %v809 = vmul.f32 %v793, 0.14285715
      %v810 = vmul.f32 %v794, 0.14285715
      %v811 = vmul.f32 %v795, 0.14285715
      %v812 = vmul.f32 %v796, 0.14285715
      %v813 = vmul.f32 %v797, 0.14285715
      %v814 = vmul.f32 %v798, 0.14285715
      %v815 = vmul.f32 %v799, 0.14285715
      %v816 = vmul.f32 %v800, 0.14285715
      %v817 = vmul.f32 %v801, 0.14285715
      %v818 = vmul.f32 %v802, 0.14285715
      %v819 = vmul.f32 %v803, 0.14285715
      %v820 = vld [vmem:[#allocation8] sm:$0xff]
      %v821 = vld [vmem:[#allocation8 + $0x8] sm:$0xff]
      %v822 = vld [vmem:[#allocation8 + $0x10] sm:$0xff]
      %v823 = vld [vmem:[#allocation8 + $0x18] sm:$0xff]
      %v824 = vld [vmem:[#allocation8 + $0x20] sm:$0xff]
      %v825 = vld [vmem:[#allocation8 + $0x28] sm:$0xff]
      %v826 = vld [vmem:[#allocation8 + $0x30] sm:$0xff]
      %v827 = vld [vmem:[#allocation8 + $0x38] sm:$0xff]
      %v828 = vld [vmem:[#allocation8 + $0x40] sm:$0xff]
      %v829 = vld [vmem:[#allocation8 + $0x48] sm:$0xff]
      %v830 = vld [vmem:[#allocation8 + $0x50] sm:$0xff]
      %v831 = vld [vmem:[#allocation8 + $0x58] sm:$0xff]
      %v832 = vld [vmem:[#allocation8 + $0x60] sm:$0xff]
      %v833 = vld [vmem:[#allocation8 + $0x68] sm:$0xff]
      %v834 = vld [vmem:[#allocation8 + $0x70] sm:$0xff]
      %v835 = vld [vmem:[#allocation8 + $0x78] sm:$0xff]
      %836 = vxpose.xlu0.b32.start [1/16] %v529, 128
      %837 = vxpose.xlu0.b32.cont [2/16] 0.0, 128
      %838 = vxpose.xlu0.b32.cont [3/16] 0.0, 128
      %839 = vxpose.xlu0.b32.cont [4/16] 0.0, 128
      %840 = vxpose.xlu0.b32.cont [5/16] 0.0, 128
      %841 = vxpose.xlu0.b32.cont [6/16] 0.0, 128
      %842 = vxpose.xlu0.b32.cont [7/16] 0.0, 128
      %843 = vxpose.xlu0.b32.cont [8/16] 0.0, 128
      %844 = vxpose.xlu0.b32.cont [9/16] 0.0, 128
      %845 = vxpose.xlu0.b32.cont [10/16] 0.0, 128
      %846 = vxpose.xlu0.b32.cont [11/16] 0.0, 128
      %847 = vxpose.xlu0.b32.cont [12/16] 0.0, 128
      %848 = vxpose.xlu0.b32.cont [13/16] 0.0, 128
      %849 = vxpose.xlu0.b32.cont [14/16] 0.0, 128
      %850 = vxpose.xlu0.b32.cont [15/16] 0.0, 128
      %851 = vxpose.xlu0.b32.end [16/16] 0.0, 128
      %v852 = vpop.trf.xlu0
      %v853 = vpop.trf.xlu0
      %v854 = vpop.trf.xlu0
      %v855 = vpop.trf.xlu0
      %v856 = vpop.trf.xlu0
      %v857 = vpop.trf.xlu0
      %v858 = vpop.trf.xlu0
      %v859 = vpop.trf.xlu0
      %v860 = vpop.trf.xlu0
      %v861 = vpop.trf.xlu0
      %v862 = vpop.trf.xlu0
      %v863 = vpop.trf.xlu0
      %v864 = vpop.trf.xlu0
      %v865 = vpop.trf.xlu0
      %v866 = vpop.trf.xlu0
      %v867 = vpop.trf.xlu0
      %v869 = vsel %vm655, %v852, 0
      %v872 = vsel %vm655, %v853, 0
      %v875 = vsel %vm655, %v854, 0
      %v878 = vsel %vm655, %v855, 0
      %v881 = vsel %vm655, %v856, 0
      %v884 = vsel %vm655, %v857, 0
      %v887 = vsel %vm655, %v858, 0
      %v890 = vsel %vm655, %v859, 0
      %v893 = vsel %vm655, %v860, 0
      %v896 = vsel %vm655, %v861, 0
      %v899 = vsel %vm655, %v862, 0
      %v902 = vsel %vm655, %v863, 0
      %v905 = vsel %vm655, %v864, 0
      %v908 = vsel %vm655, %v865, 0
      %v911 = vsel %vm655, %v866, 0
      %v914 = vsel %vm655, %v867, 0
      %v917 = vsel %vm579, %v529, 0
      %919 = vmatpush.msra.mxu0 0.0
      %920 = vmatpush.msra.mxu0 0.0
      %921 = vmatpush.msra.mxu0 0.0
      %922 = vmatpush.msra.mxu0 0.0
      %923 = vmatpush.msra.mxu0 0.0
      %924 = vmatpush.msra.mxu0 0.0
      %925 = vmatpush.msra.mxu0 0.0
      %926 = vmatpush.msra.mxu0 0.0
      %927 = vmatpush.msra.mxu0 0.0
      %928 = vmatpush.msra.mxu0 0.0
      %929 = vmatpush.msra.mxu0 0.0
      %930 = vmatpush.msra.mxu0 0.0
      %931 = vmatpush.msra.mxu0 0.0
      %932 = vmatpush.msra.mxu0 0.0
      %933 = vmatpush.msra.mxu0 0.0
      %934 = vmatpush.msra.mxu0 %v917
      %935 = vmatmul.f32.gmra.mxu0 %v869
      %v936 = vpop.f32.mrf.mxu0
      %v937 = vadd.f32 0.0, %v936
      %938 = vmatmul.f32.gmra.mxu0 %v872
      %v939 = vpop.f32.mrf.mxu0
      %v940 = vadd.f32 0.0, %v939
      %941 = vmatmul.f32.gmra.mxu0 %v875
      %v942 = vpop.f32.mrf.mxu0
      %v943 = vadd.f32 0.0, %v942
      %944 = vmatmul.f32.gmra.mxu0 %v878
      %v945 = vpop.f32.mrf.mxu0
      %v946 = vadd.f32 0.0, %v945
      %947 = vmatmul.f32.gmra.mxu0 %v881
      %v948 = vpop.f32.mrf.mxu0
      %v949 = vadd.f32 0.0, %v948
      %950 = vmatmul.f32.gmra.mxu0 %v884
      %v951 = vpop.f32.mrf.mxu0
      %v952 = vadd.f32 0.0, %v951
      %953 = vmatmul.f32.gmra.mxu0 %v887
      %v954 = vpop.f32.mrf.mxu0
      %v955 = vadd.f32 0.0, %v954
      %956 = vmatmul.f32.gmra.mxu0 %v890
      %v957 = vpop.f32.mrf.mxu0
      %v958 = vadd.f32 0.0, %v957
      %959 = vmatmul.f32.gmra.mxu0 %v893
      %v960 = vpop.f32.mrf.mxu0
      %v961 = vadd.f32 0.0, %v960
      %962 = vmatmul.f32.gmra.mxu0 %v896
      %v963 = vpop.f32.mrf.mxu0
      %v964 = vadd.f32 0.0, %v963
      %965 = vmatmul.f32.gmra.mxu0 %v899
      %v966 = vpop.f32.mrf.mxu0
      %v967 = vadd.f32 0.0, %v966
      %968 = vmatmul.f32.gmra.mxu0 %v902
      %v969 = vpop.f32.mrf.mxu0
      %v970 = vadd.f32 0.0, %v969
      %971 = vmatmul.f32.gmra.mxu0 %v905
      %v972 = vpop.f32.mrf.mxu0
      %v973 = vadd.f32 0.0, %v972
      %974 = vmatmul.f32.gmra.mxu0 %v908
      %v975 = vpop.f32.mrf.mxu0
      %v976 = vadd.f32 0.0, %v975
      %977 = vmatmul.f32.gmra.mxu0 %v911
      %v978 = vpop.f32.mrf.mxu0
      %v979 = vadd.f32 0.0, %v978
      %980 = vmatmul.f32.gmra.mxu0 %v914
      %v981 = vpop.f32.mrf.mxu0
      %v982 = vadd.f32 0.0, %v981
      %983 = vdwg.mxu0
      %v984 = vmul.f32 %v937, %v538
      %v985 = vmul.f32 %v940, %v538
      %v986 = vmul.f32 %v943, %v538
      %v987 = vmul.f32 %v946, %v538
      %v988 = vmul.f32 %v949, %v538
      %v989 = vmul.f32 %v952, %v538
      %v990 = vmul.f32 %v955, %v538
      %v991 = vmul.f32 %v958, %v538
      %v992 = vmul.f32 %v961, %v538
      %v993 = vmul.f32 %v964, %v538
      %v994 = vmul.f32 %v967, %v538
      %v995 = vmul.f32 %v970, %v538
      %v996 = vmul.f32 %v973, %v538
      %v997 = vmul.f32 %v976, %v538
      %v998 = vmul.f32 %v979, %v538
      %v999 = vmul.f32 %v982, %v538
      %v1000 = vsub.f32 %v820, %v984
      %v1001 = vsub.f32 %v821, %v985
      %v1002 = vsub.f32 %v822, %v986
      %v1003 = vsub.f32 %v823, %v987
      %v1004 = vsub.f32 %v824, %v988
      %v1005 = vsub.f32 %v825, %v989
      %v1006 = vsub.f32 %v826, %v990
      %v1007 = vsub.f32 %v827, %v991
      %v1008 = vsub.f32 %v828, %v992
      %v1009 = vsub.f32 %v829, %v993
      %v1010 = vsub.f32 %v830, %v994
      %v1011 = vsub.f32 %v831, %v995
      %v1012 = vsub.f32 %v832, %v996
      %v1013 = vsub.f32 %v833, %v997
      %v1014 = vsub.f32 %v834, %v998
      %v1015 = vsub.f32 %v835, %v999
      %v1016 = vmul.f32 %v1000, 0.14285715
      %v1017 = vmul.f32 %v1001, 0.14285715
      %v1018 = vmul.f32 %v1002, 0.14285715
      %v1019 = vmul.f32 %v1003, 0.14285715
      %v1020 = vmul.f32 %v1004, 0.14285715
      %v1021 = vmul.f32 %v1005, 0.14285715
      %v1022 = vmul.f32 %v1006, 0.14285715
      %v1023 = vmul.f32 %v1007, 0.14285715
      %v1024 = vmul.f32 %v1008, 0.14285715
      %v1025 = vmul.f32 %v1009, 0.14285715
      %v1026 = vmul.f32 %v1010, 0.14285715
      %v1027 = vmul.f32 %v1011, 0.14285715
      %v1028 = vmul.f32 %v1012, 0.14285715
      %v1029 = vmul.f32 %v1013, 0.14285715
      %v1030 = vmul.f32 %v1014, 0.14285715
      %v1031 = vmul.f32 %v1015, 0.14285715
      %v1032 = vmul.f32 %v804, %v804
      %v1033 = vmul.f32 %v805, %v805
      %v1034 = vmul.f32 %v806, %v806
      %v1035 = vmul.f32 %v807, %v807
      %v1036 = vmul.f32 %v808, %v808
      %v1037 = vmul.f32 %v809, %v809
      %v1038 = vmul.f32 %v810, %v810
      %v1039 = vmul.f32 %v811, %v811
      %v1040 = vmul.f32 %v812, %v812
      %v1041 = vmul.f32 %v813, %v813
      %v1042 = vmul.f32 %v814, %v814
      %v1043 = vmul.f32 %v815, %v815
      %v1044 = vmul.f32 %v816, %v816
      %v1045 = vmul.f32 %v817, %v817
      %v1046 = vmul.f32 %v818, %v818
      %v1047 = vmul.f32 %v819, %v819
      %v1048 = vadd.f32 %v1032, %v1033
      %v1049 = vadd.f32 %v1048, %v1034
      %v1050 = vadd.f32 %v1049, %v1035
      %v1051 = vadd.f32 %v1050, %v1036
      %v1052 = vadd.f32 %v1051, %v1037
      %v1053 = vadd.f32 %v1052, %v1038
      %v1054 = vadd.f32 %v1053, %v1039
      %v1055 = vadd.f32 %v1054, %v1040
      %v1056 = vadd.f32 %v1055, %v1041
      %v1057 = vadd.f32 %v1056, %v1042
      %v1058 = vadd.f32 %v1057, %v1043
      %v1059 = vadd.f32 %v1058, %v1044
      %v1060 = vadd.f32 %v1059, %v1045
      %v1061 = vadd.f32 %v1060, %v1046
      %v1062 = vadd.f32 %v1061, %v1047
      %1063 = vadd.xlane.f32.xlu0 %v1062
      %v1064 = vpop.xlane.xlu0 %1063
      %v1065 = vrot.slane %v1064, 4
      %v1066 = vadd.f32 %v1064, %v1065
      %v1067 = vrot.slane %v1066, 2
      %v1068 = vadd.f32 %v1066, %v1067
      %v1069 = vrot.slane %v1068, 1
      %v1070 = vadd.f32 %v1068, %v1069
      %s1071 = vtos %v1070
      %v1072 = vmul.f32 %v541, %v541
      %v1073 = vsel %vm579, %v1072, 0.0
      %1074 = vadd.xlane.f32.xlu0 %v1073
      %v1075 = vpop.xlane.xlu0 %1074
      %v1076 = vrot.slane %v1075, 4
      %v1077 = vadd.f32 %v1075, %v1076
      %v1078 = vrot.slane %v1077, 2
      %v1079 = vadd.f32 %v1077, %v1078
      %v1080 = vrot.slane %v1079, 1
      %v1081 = vadd.f32 %v1079, %v1080
      %s1082 = vtos %v1081
      %s1083 = ssub.f32 %s1071, %s1082
      %v1084 = vmul.f32 %v1016, %v1016
      %v1085 = vmul.f32 %v1017, %v1017
      %v1086 = vmul.f32 %v1018, %v1018
      %v1087 = vmul.f32 %v1019, %v1019
      %v1088 = vmul.f32 %v1020, %v1020
      %v1089 = vmul.f32 %v1021, %v1021
      %v1090 = vmul.f32 %v1022, %v1022
      %v1091 = vmul.f32 %v1023, %v1023
      %v1092 = vmul.f32 %v1024, %v1024
      %v1093 = vmul.f32 %v1025, %v1025
      %v1094 = vmul.f32 %v1026, %v1026
      %v1095 = vmul.f32 %v1027, %v1027
      %v1096 = vmul.f32 %v1028, %v1028
      %v1097 = vmul.f32 %v1029, %v1029
      %v1098 = vmul.f32 %v1030, %v1030
      %v1099 = vmul.f32 %v1031, %v1031
      %v1100 = vadd.f32 %v1084, %v1085
      %v1101 = vadd.f32 %v1100, %v1086
      %v1102 = vadd.f32 %v1101, %v1087
      %v1103 = vadd.f32 %v1102, %v1088
      %v1104 = vadd.f32 %v1103, %v1089
      %v1105 = vadd.f32 %v1104, %v1090
      %v1106 = vadd.f32 %v1105, %v1091
      %v1107 = vadd.f32 %v1106, %v1092
      %v1108 = vadd.f32 %v1107, %v1093
      %v1109 = vadd.f32 %v1108, %v1094
      %v1110 = vadd.f32 %v1109, %v1095
      %v1111 = vadd.f32 %v1110, %v1096
      %v1112 = vadd.f32 %v1111, %v1097
      %v1113 = vadd.f32 %v1112, %v1098
      %v1114 = vadd.f32 %v1113, %v1099
      %1115 = vadd.xlane.f32.xlu0 %v1114
      %v1116 = vpop.xlane.xlu0 %1115
      %v1117 = vrot.slane %v1116, 4
      %v1118 = vadd.f32 %v1116, %v1117
      %v1119 = vrot.slane %v1118, 2
      %v1120 = vadd.f32 %v1118, %v1119
      %v1121 = vrot.slane %v1120, 1
      %v1122 = vadd.f32 %v1120, %v1121
      %s1123 = vtos %v1122
      %v1124 = vmul.f32 %v546, %v546
      %v1125 = vsel %vm579, %v1124, 0.0
      %1126 = vadd.xlane.f32.xlu0 %v1125
      %v1127 = vpop.xlane.xlu0 %1126
      %v1128 = vrot.slane %v1127, 4
      %v1129 = vadd.f32 %v1127, %v1128
      %v1130 = vrot.slane %v1129, 2
      %v1131 = vadd.f32 %v1129, %v1130
      %v1132 = vrot.slane %v1131, 1
      %v1133 = vadd.f32 %v1131, %v1132
      %s1134 = vtos %v1133
      %s1135 = ssub.f32 %s1123, %s1134
      %s1136 = sadd.f32 %s1083, %s1135
      %s1137 = smul.f32 %s1136, 0.03125
      %v1138 = vmul.f32 %v606, 25.0
      %s1139 = smul.f32 %s604, 25.0
      %v1140 = vstv %s1139
      %v1141 = vadd.f32 %v1138, %v1140
      %v1142 = vstv %s1137
      %v1143 = vadd.f32 %v1141, %v1142
      %1144 = vst.msk [vmem:[#allocation14] sm:$0x1] %vm136, %v1143
    $region25: #{tpu_custom_call.1} parent=1 // pred_fallthru
      _
    // Predicated region
    $region26: #{tpu_custom_call.1} parent=1 // pred_check
      _
    $region27: #{tpu_custom_call.1} parent=1 // pred_check_branch
      %1146 = sbr.rel (0) target = $region29
    $region28: #{tpu_custom_call.1} parent=1 // pred_region
      %1148 = vsyncadd [#allocation11], 0
      %s1150 = sshll.u32 [#allocation14], 4
      %s1151 = int_to_ptr.vmem [resolvable:$true] %s1150
      %s1152 = sshll.u32 %s2, 4
      %s1153 = int_to_ptr.hbm [resolvable:$true] %s1152
      %1155 = dma.vmem_to_hbm [thread:$0]  %s1151, 16, %s1153, [#allocation11]
    $region29: #{tpu_custom_call.1} parent=1 // pred_fallthru
      _
    // Predicated region
    $region30: #{tpu_custom_call.1} parent=1 // pred_check
      _
    $region31: #{tpu_custom_call.1} parent=1 // pred_check_branch
      %1157 = sbr.rel (0) target = $region33
    $region32: #{tpu_custom_call.1} parent=1 // pred_region
      %1159 = dma.done [#allocation11], 16
    $region33: #{tpu_custom_call.1} parent=1 // pred_fallthru
      _
    %1160 = vsyncpa [#allocation10], 1
    %1161 = vsyncpa [#allocation13], 1
    %1162 = vsyncpa [#allocation11], 1

</llo_original>
